<compile_context>
chip_gen: v7x
topology: tpu7x:2x2x1
jax: 0.10.0
libtpu: 0.0.40
codegen_flags: <defaults>
</compile_context>

<pallas_src>
import math

import jax
import jax.numpy as jnp
from jax.experimental import pallas as pl
from jax.experimental.pallas import tpu as pltpu


def _dqn_kernel(x_ref, w1_ref, b1_ref, w2_ref, b2_ref, w3_ref, b3_ref, o_ref):
    cdt = w1_ref.dtype  # MXU input dtype (f32 or bf16); accumulate in f32.
    x = x_ref[...].astype(cdt)
    # hidden layer 1: relu(x @ W1 + b1)
    h1 = jnp.dot(x, w1_ref[...], preferred_element_type=jnp.float32)
    h1 = jnp.maximum(h1 + b1_ref[...], 0.0)
    # hidden layer 2: relu(h1 @ W2 + b2)
    h2 = jnp.dot(h1.astype(cdt), w2_ref[...], preferred_element_type=jnp.float32)
    h2 = jnp.maximum(h2 + b2_ref[...], 0.0)
    # output layer (no activation), written at true D_out width
    o = jnp.dot(h2.astype(cdt), w3_ref[...], preferred_element_type=jnp.float32)
    o_ref[...] = o + b3_ref[...]


def _round_up(n, m):
    return ((n + m - 1) // m) * m


def prepare_params(params, weight_dtype=jnp.bfloat16):
    """Prepare params ONCE (cache and reuse across forward calls).

    No padding: full-extent weight/bias blocks are exempt from the (8,128)
    divisibility rule, so the true shapes (D_in,H1), (H1,H2), (H2,D_out) are
    used directly. Weights are stored (in_features, out_features) and cast to
    `weight_dtype` (bf16 default). Biases stay f32 (f32 VPU epilogue).
    """
    (w1, b1), (w2, b2), (w3, b3) = params["l1"], params["l2"], params["l3"]
    D_in, H1 = w1.shape
    H2 = w2.shape[1]
    D_out = w3.shape[1]
    return {
        "w1": w1.astype(weight_dtype),
        "b1": b1.reshape(1, -1).astype(jnp.float32),
        "w2": w2.astype(weight_dtype),
        "b2": b2.reshape(1, -1).astype(jnp.float32),
        "w3": w3.astype(weight_dtype),
        "b3": b3.reshape(1, -1).astype(jnp.float32),
        "dims": (D_in, H1, H2, D_out),
    }


def dqn_forward(x, padded_params, *, batch_tile=4096, gridless_cutoff=512):
    """x: (batch, input_size), f32 or bf16. padded_params: prepare_params() output."""
    D_in, H1, H2, D_out = padded_params["dims"]
    B = x.shape[0]
    assert x.shape[1] == D_in, (x.shape, D_in)

    args = (
        padded_params["w1"], padded_params["b1"],
        padded_params["w2"], padded_params["b2"],
        padded_params["w3"], padded_params["b3"],
    )

    if B <= gridless_cutoff:
        # Small batch (action selection): single shot, no grid -> no pipeline
        # setup, no double buffering. Everything explicitly VMEM-resident.
        vmem = pl.BlockSpec(memory_space=pltpu.MemorySpace.VMEM)
        return pl.pallas_call(
            _dqn_kernel,
            out_shape=jax.ShapeDtypeStruct((B, D_out), jnp.float32),
            in_specs=[vmem] * 7,
            out_specs=vmem,
        )(x, *args)

    # Large batch (replay buffer): 1-D grid over the batch axis, no padding of
    # x and no output slice -- Pallas masks the partial final block's writes.
    # TB: big enough to amortize per-step overhead, but capped so there are
    # always >=2 grid steps for v7x's two TensorCores to split.
    batch_tile = max(_round_up(batch_tile, 8), 8)
    half = -(-B // 2)  # ceil(B / 2)
    TB = min(batch_tile, _round_up(half, 256))
    grid = (pl.cdiv(B, TB),)

    return pl.pallas_call(
        _dqn_kernel,
        out_shape=jax.ShapeDtypeStruct((B, D_out), jnp.float32),
        grid=grid,
        in_specs=[
            pl.BlockSpec((TB, D_in), lambda i: (i, 0)),   # x: streamed per tile
            pl.BlockSpec((D_in, H1), lambda i: (0, 0)),   # weights: VMEM-resident
            pl.BlockSpec((1, H1), lambda i: (0, 0)),
            pl.BlockSpec((H1, H2), lambda i: (0, 0)),
            pl.BlockSpec((1, H2), lambda i: (0, 0)),
            pl.BlockSpec((H2, D_out), lambda i: (0, 0)),
            pl.BlockSpec((1, D_out), lambda i: (0, 0)),
        ],
        out_specs=pl.BlockSpec((TB, D_out), lambda i: (i, 0)),
        compiler_params=pltpu.CompilerParams(
            dimension_semantics=("parallel",),  # batch axis shards across TCs (v7x)
        ),
    )(x, *args)


def init_dqn_params(key, input_size, hidden_sizes, output_size):
    """Deterministic init mimicking torch.nn.Linear default (uniform +-1/sqrt(fan_in)).
    Weights stored as (in_features, out_features)."""
    sizes = [input_size] + list(hidden_sizes) + [output_size]
    names = ["l1", "l2", "l3"]
    params = {}
    for name, (fan_in, fan_out) in zip(names, zip(sizes[:-1], sizes[1:])):
        key, kw, kb = jax.random.split(key, 3)
        bound = 1.0 / math.sqrt(fan_in)
        w = jax.random.uniform(kw, (fan_in, fan_out), jnp.float32, -bound, bound)
        b = jax.random.uniform(kb, (fan_out,), jnp.float32, -bound, bound)
        params[name] = (w, b)
    return params


def _reference_forward(x, params):
    (w1, b1), (w2, b2), (w3, b3) = params["l1"], params["l2"], params["l3"]
    h = jnp.maximum(x @ w1 + b1, 0.0)
    h = jnp.maximum(h @ w2 + b2, 0.0)
    return h @ w3 + b3


if __name__ == "__main__":
    # DQN(input_size=32, hidden_sizes=[32, 16], output_size=1)
    input_size, hidden_sizes, output_size = 32, [32, 16], 1
    batch = 2

    key = jax.random.PRNGKey(0)
    key, kx = jax.random.split(key)
    x = jax.random.normal(kx, (batch, input_size), jnp.float32)
    params = init_dqn_params(key, input_size, hidden_sizes, output_size)
    ref = _reference_forward(x, params)

    # 1) Tiny batch, f32 params, gridless VMEM path: tight tolerance.
    pp_f32 = prepare_params(params, weight_dtype=jnp.float32)
    out = jax.block_until_ready(dqn_forward(x, pp_f32))
    assert out.shape == (batch, output_size), out.shape
    assert jnp.allclose(out, ref, atol=1e-5, rtol=1e-5), (out, ref)

    # 2) Tiny batch, bf16 weights (perf default), bf16 x: looser tolerance.
    pp_bf16 = prepare_params(params)  # bf16 weights, f32 biases
    out_bf16 = jax.block_until_ready(dqn_forward(x.astype(jnp.bfloat16), pp_bf16))
    assert out_bf16.shape == (batch, output_size)
    assert jnp.allclose(out_bf16, ref, atol=3e-2, rtol=3e-2), (out_bf16, ref)

    # 3) Ragged batch exercises the unpadded cdiv-grid path (partial last block),
    #    f32 weights for a tight check; small batch_tile keeps the demo small.
    big_batch = 300
    key, kb = jax.random.split(key)
    xb = jax.random.normal(kb, (big_batch, input_size), jnp.float32)
    ref_big = _reference_forward(xb, params)
    out_big = jax.block_until_ready(
        dqn_forward(xb, pp_f32, batch_tile=128, gridless_cutoff=64))
    assert out_big.shape == (big_batch, output_size), out_big.shape
    assert jnp.allclose(out_big, ref_big, atol=1e-4, rtol=1e-4), (out_big, ref_big)

    # 4) Same ragged batch with default tiling heuristics (TB capped so the
    #    parallel grid has >=2 steps) and bf16 weights: the realistic perf path.
    out_big_bf16 = jax.block_until_ready(
        dqn_forward(xb, pp_bf16, gridless_cutoff=64))
    assert out_big_bf16.shape == (big_batch, output_size)
    assert jnp.allclose(out_big_bf16, ref_big, atol=3e-2, rtol=3e-2)

    print("KERNEL_OK")
</pallas_src>

<mosaic_0001>
module attributes {stable_mosaic.version = 11 : i64} {
  func.func @_dqn_kernel(%arg0: memref<2x32xf32, #tpu.memory_space<vmem>>, %arg1: memref<32x32xf32, #tpu.memory_space<vmem>>, %arg2: memref<1x32xf32, #tpu.memory_space<vmem>>, %arg3: memref<32x16xf32, #tpu.memory_space<vmem>>, %arg4: memref<1x16xf32, #tpu.memory_space<vmem>>, %arg5: memref<16x1xf32, #tpu.memory_space<vmem>>, %arg6: memref<1x1xf32, #tpu.memory_space<vmem>>, %arg7: memref<2x1xf32, #tpu.memory_space<vmem>>) attributes {dimension_semantics = [], scalar_prefetch = 0 : i64, scratch_operands = 0 : i64, tpu.core_type = #tpu.core_type<tc>} {
    %c0 = arith.constant 0 : index
    %c0_0 = arith.constant 0 : index
    %0 = vector.load %arg0[%c0, %c0_0] : memref<2x32xf32, #tpu.memory_space<vmem>>, vector<2x32xf32>
    %c0_1 = arith.constant 0 : index
    %c0_2 = arith.constant 0 : index
    %1 = vector.load %arg1[%c0_1, %c0_2] : memref<32x32xf32, #tpu.memory_space<vmem>>, vector<32x32xf32>
    %cst = arith.constant dense<0.000000e+00> : vector<2x32xf32>
    %2 = tpu.matmul %0, %1, %cst {dimension_numbers = #tpu.dot_dimension_numbers<[1], [0], [0], [1], [0, 0, 1, 1], [], []>} : vector<2x32xf32>, vector<32x32xf32>, vector<2x32xf32> -> vector<2x32xf32>
    %c0_3 = arith.constant 0 : index
    %c0_4 = arith.constant 0 : index
    %3 = vector.load %arg2[%c0_3, %c0_4] : memref<1x32xf32, #tpu.memory_space<vmem>>, vector<1x32xf32>
    %4 = vector.broadcast %3 : vector<1x32xf32> to vector<2x32xf32>
    %5 = arith.addf %2, %4 : vector<2x32xf32>
    %cst_5 = arith.constant 0.000000e+00 : f32
    %6 = vector.broadcast %cst_5 : f32 to vector<2x32xf32>
    %7 = arith.maximumf %5, %6 : vector<2x32xf32>
    %c0_6 = arith.constant 0 : index
    %c0_7 = arith.constant 0 : index
    %8 = vector.load %arg3[%c0_6, %c0_7] : memref<32x16xf32, #tpu.memory_space<vmem>>, vector<32x16xf32>
    %cst_8 = arith.constant dense<0.000000e+00> : vector<2x16xf32>
    %9 = tpu.matmul %7, %8, %cst_8 {dimension_numbers = #tpu.dot_dimension_numbers<[1], [0], [0], [1], [0, 0, 1, 1], [], []>} : vector<2x32xf32>, vector<32x16xf32>, vector<2x16xf32> -> vector<2x16xf32>
    %c0_9 = arith.constant 0 : index
    %c0_10 = arith.constant 0 : index
    %10 = vector.load %arg4[%c0_9, %c0_10] : memref<1x16xf32, #tpu.memory_space<vmem>>, vector<1x16xf32>
    %11 = vector.broadcast %10 : vector<1x16xf32> to vector<2x16xf32>
    %12 = arith.addf %9, %11 : vector<2x16xf32>
    %cst_11 = arith.constant 0.000000e+00 : f32
    %13 = vector.broadcast %cst_11 : f32 to vector<2x16xf32>
    %14 = arith.maximumf %12, %13 : vector<2x16xf32>
    %c0_12 = arith.constant 0 : index
    %c0_13 = arith.constant 0 : index
    %15 = vector.load %arg5[%c0_12, %c0_13] : memref<16x1xf32, #tpu.memory_space<vmem>>, vector<16x1xf32>
    %cst_14 = arith.constant dense<0.000000e+00> : vector<2x1xf32>
    %16 = tpu.matmul %14, %15, %cst_14 {dimension_numbers = #tpu.dot_dimension_numbers<[1], [0], [0], [1], [0, 0, 1, 1], [], []>} : vector<2x16xf32>, vector<16x1xf32>, vector<2x1xf32> -> vector<2x1xf32>
    %c0_15 = arith.constant 0 : index
    %c0_16 = arith.constant 0 : index
    %17 = vector.load %arg6[%c0_15, %c0_16] : memref<1x1xf32, #tpu.memory_space<vmem>>, vector<1x1xf32>
    %18 = vector.broadcast %17 : vector<1x1xf32> to vector<2x1xf32>
    %19 = arith.addf %16, %18 : vector<2x1xf32>
    %c0_17 = arith.constant 0 : index
    %c0_18 = arith.constant 0 : index
    %20 = vector.load %arg7[%c0_17, %c0_18] : memref<2x1xf32, #tpu.memory_space<vmem>>, vector<2x1xf32>
    tpu.vector_store %arg7[%c0_17, %c0_18], %19 {strides = array<i32>} : memref<2x1xf32, #tpu.memory_space<vmem>>, vector<2x1xf32>,
    return
  }
}

</mosaic_0001>

<llo_original>
// kernel: tpu_custom_call.1
$region0: #{tpu_custom_call.1}
  #allocation0 [shape = 'u32[]', space=smem, size = 0x4, offset = 0x4, fixed_abs, tag = 'smem constant byte address 0x4 - core index']
  #allocation1 [shape = 'u32[144,128]{1,0:T(1,128)}', space=vmem, size = 0x12000, scoped, tag = 'internal scratch']
  #allocation2 [shape = 'f32[1,1]{1,0:T(1,128)S(1)}', space=vmem, size = 0x200, scoped, tag = 'scoped memory for tpu_custom_call.1']
  %s0 = inlined_call_operand.vmem [shape: f32[2,32], index: 0, kind: input, shape index: {}]
  %s1 = inlined_call_operand.vmem [shape: f32[32,32], index: 1, kind: input, shape index: {}]
  %s2 = inlined_call_operand.vmem [shape: f32[1,32], index: 2, kind: input, shape index: {}]
  %s3 = inlined_call_operand.vmem [shape: f32[32,16], index: 3, kind: input, shape index: {}]
  %s4 = inlined_call_operand.vmem [shape: f32[1,16], index: 4, kind: input, shape index: {}]
  %s5 = inlined_call_operand.vmem [shape: f32[16,1], index: 5, kind: input, shape index: {}]
  %s6 = inlined_call_operand.<no memory space> [shape: f32[1,1], index: 6, kind: input, shape index: {}]
  %s7 = inlined_call_operand.vmem [shape: f32[2,1], index: 7, kind: output, shape index: {}]
  %s8 = sld [smem:[#allocation0]]
  $region38: #{tpu_custom_call.1} parent=0
    _
  %s10 = ssub.s32 1, %s8
  %s11 = scalar_select 0, %s10, %s8
  %v12 = vstv %s6
  %13 = vst [vmem:[#allocation2] sm:$0x1] %v12
  // Predicated region
  $region2: #{tpu_custom_call.1} parent=0 // pred_check
    _
  $region3: #{tpu_custom_call.1} parent=0 // pred_check_branch
    %15 = sbr.rel (0) target = $region5
  $region4: #{tpu_custom_call.1} parent=0 // pred_region
    _
  $region5: #{tpu_custom_call.1} parent=0 // pred_fallthru
    _
  // Predicated region
  $region6: #{tpu_custom_call.1} parent=0 // pred_check
    _
  $region7: #{tpu_custom_call.1} parent=0 // pred_check_branch
    %17 = sbr.rel (0) target = $region9
  $region8: #{tpu_custom_call.1} parent=0 // pred_region
    _
  $region9: #{tpu_custom_call.1} parent=0 // pred_fallthru
    _
  // Predicated region
  $region10: #{tpu_custom_call.1} parent=0 // pred_check
    _
  $region11: #{tpu_custom_call.1} parent=0 // pred_check_branch
    %19 = sbr.rel (0) target = $region13
  $region12: #{tpu_custom_call.1} parent=0 // pred_region
    _
  $region13: #{tpu_custom_call.1} parent=0 // pred_fallthru
    _
  // Predicated region
  $region14: #{tpu_custom_call.1} parent=0 // pred_check
    _
  $region15: #{tpu_custom_call.1} parent=0 // pred_check_branch
    %21 = sbr.rel (0) target = $region17
  $region16: #{tpu_custom_call.1} parent=0 // pred_region
    _
  $region17: #{tpu_custom_call.1} parent=0 // pred_fallthru
    _
  // Predicated region
  $region18: #{tpu_custom_call.1} parent=0 // pred_check
    _
  $region19: #{tpu_custom_call.1} parent=0 // pred_check_branch
    %23 = sbr.rel (0) target = $region21
  $region20: #{tpu_custom_call.1} parent=0 // pred_region
    _
  $region21: #{tpu_custom_call.1} parent=0 // pred_fallthru
    _
  // Predicated region
  $region22: #{tpu_custom_call.1} parent=0 // pred_check
    _
  $region23: #{tpu_custom_call.1} parent=0 // pred_check_branch
    %25 = sbr.rel (0) target = $region25
  $region24: #{tpu_custom_call.1} parent=0 // pred_region
    _
  $region25: #{tpu_custom_call.1} parent=0 // pred_fallthru
    _
  // Predicated region
  $region26: #{tpu_custom_call.1} parent=0 // pred_check
    _
  $region27: #{tpu_custom_call.1} parent=0 // pred_check_branch
    %27 = sbr.rel (0) target = $region29
  $region28: #{tpu_custom_call.1} parent=0 // pred_region
    _
  $region29: #{tpu_custom_call.1} parent=0 // pred_fallthru
    _
  %v28 = vld [vmem:[%s0] sm:$0x3]
  %v29 = vld [vmem:[%s1] sm:$0xff]
  %v30 = vld [vmem:[%s1 + $0x8] sm:$0xff]
  %v31 = vld [vmem:[%s1 + $0x10] sm:$0xff]
  %v32 = vld [vmem:[%s1 + $0x18] sm:$0xff]
  %v33 = vld [vmem:[%s2] sm:$0x1]
  %v35 = vlaneseq
  %v36 = vshrl.u32 %v35, 7
  %v37 = vsub.s32 0, %v36
  %v38 = vrot.slane %v33, %v37
  %vm40 = vcmask 261120
  %v42 = vsel %vm40, %v28, 0
  %44 = vmatprep.subr.mxu0 0.0
  %45 = vmatpush1.msra.mxu0 %v29
  %46 = vmatprep.subr.mxu0 0.0
  %47 = vmatpush1.msra.mxu0 %v30
  %48 = vmatprep.subr.mxu0 0.0
  %49 = vmatpush1.msra.mxu0 %v31
  %50 = vmatprep.subr.mxu0 0.0
  %51 = vmatpush1.msra.mxu0 %v32
  %52 = vmatprep.subr.mxu0 0.0
  %53 = vmatpush1.msra.mxu0 0.0
  %54 = vmatprep.subr.mxu0 0.0
  %55 = vmatpush1.msra.mxu0 0.0
  %56 = vmatprep.subr.mxu0 0.0
  %57 = vmatpush1.msra.mxu0 0.0
  %58 = vmatprep.subr.mxu0 0.0
  %59 = vmatpush1.msra.mxu0 0.0
  %60 = vmatprep.subr.mxu0 0.0
  %61 = vmatpush1.msra.mxu0 0.0
  %62 = vmatprep.subr.mxu0 0.0
  %63 = vmatpush1.msra.mxu0 0.0
  %64 = vmatprep.subr.mxu0 0.0
  %65 = vmatpush1.msra.mxu0 0.0
  %66 = vmatprep.subr.mxu0 0.0
  %67 = vmatpush1.msra.mxu0 0.0
  %68 = vmatprep.subr.mxu0 0.0
  %69 = vmatpush1.msra.mxu0 0.0
  %70 = vmatprep.subr.mxu0 0.0
  %71 = vmatpush1.msra.mxu0 0.0
  %72 = vmatprep.subr.mxu0 0.0
  %73 = vmatpush1.msra.mxu0 0.0
  %74 = vmatprep.subr.mxu0 0.0
  %75 = vmatpush1.msra.mxu0 0.0
  %76 = vmatprep.subr.mxu0 0.0
  %77 = vmatpush1.msra.mxu0 0.0
  %78 = vmatprep.subr.mxu0 0.0
  %79 = vmatpush1.msra.mxu0 0.0
  %80 = vmatprep.subr.mxu0 0.0
  %81 = vmatpush1.msra.mxu0 0.0
  %82 = vmatprep.subr.mxu0 0.0
  %83 = vmatpush1.msra.mxu0 0.0
  %84 = vmatprep.subr.mxu0 0.0
  %85 = vmatpush1.msra.mxu0 0.0
  %86 = vmatprep.subr.mxu0 0.0
  %87 = vmatpush1.msra.mxu0 0.0
  %88 = vmatprep.subr.mxu0 0.0
  %89 = vmatpush1.msra.mxu0 0.0
  %90 = vmatprep.subr.mxu0 0.0
  %91 = vmatpush1.msra.mxu0 0.0
  %92 = vmatprep.subr.mxu0 0.0
  %93 = vmatpush1.msra.mxu0 0.0
  %94 = vmatprep.subr.mxu0 0.0
  %95 = vmatpush1.msra.mxu0 0.0
  %96 = vmatprep.subr.mxu0 0.0
  %97 = vmatpush1.msra.mxu0 0.0
  %98 = vmatprep.subr.mxu0 0.0
  %99 = vmatpush1.msra.mxu0 0.0
  %100 = vmatprep.subr.mxu0 0.0
  %101 = vmatpush1.msra.mxu0 0.0
  %102 = vmatprep.subr.mxu0 0.0
  %103 = vmatpush1.msra.mxu0 0.0
  %104 = vmatprep.subr.mxu0 0.0
  %105 = vmatpush1.msra.mxu0 0.0
  %106 = vmatprep.subr.mxu0 0.0
  %107 = vmatpush1.msra.mxu0 0.0
  %108 = vmatprep.mubr.f32.mxu0 0.0
  %109 = vmatmul.mubr.f32.gmra.mrb[0].mxu0 %v42
  %v110 = vpop.f32.mrb[0].mxu0
  %v111 = vadd.f32 %v38, %v110
  %v112 = vpop.f32.mrb[0].mxu0
  %113 = vdwg.mxu0
  %v114 = vmax.f32 %v111, 0.0
  %v115 = vld [vmem:[%s3] sm:$0xff]
  %v116 = vld [vmem:[%s3 + $0x8] sm:$0xff]
  %v117 = vld [vmem:[%s3 + $0x10] sm:$0xff]
  %v118 = vld [vmem:[%s3 + $0x18] sm:$0xff]
  %v119 = vld [vmem:[%s4] sm:$0x1]
  %v121 = vlaneseq
  %v122 = vshrl.u32 %v121, 7
  %v123 = vsub.s32 0, %v122
  %v124 = vrot.slane %v119, %v123
  %v127 = vsel %vm40, %v114, 0
  %129 = vmatprep.subr.mxu0 0.0
  %130 = vmatpush1.msra.mxu0 %v115
  %131 = vmatprep.subr.mxu0 0.0
  %132 = vmatpush1.msra.mxu0 %v116
  %133 = vmatprep.subr.mxu0 0.0
  %134 = vmatpush1.msra.mxu0 %v117
  %135 = vmatprep.subr.mxu0 0.0
  %136 = vmatpush1.msra.mxu0 %v118
  %137 = vmatprep.subr.mxu0 0.0
  %138 = vmatpush1.msra.mxu0 0.0
  %139 = vmatprep.subr.mxu0 0.0
  %140 = vmatpush1.msra.mxu0 0.0
  %141 = vmatprep.subr.mxu0 0.0
  %142 = vmatpush1.msra.mxu0 0.0
  %143 = vmatprep.subr.mxu0 0.0
  %144 = vmatpush1.msra.mxu0 0.0
  %145 = vmatprep.subr.mxu0 0.0
  %146 = vmatpush1.msra.mxu0 0.0
  %147 = vmatprep.subr.mxu0 0.0
  %148 = vmatpush1.msra.mxu0 0.0
  %149 = vmatprep.subr.mxu0 0.0
  %150 = vmatpush1.msra.mxu0 0.0
  %151 = vmatprep.subr.mxu0 0.0
  %152 = vmatpush1.msra.mxu0 0.0
  %153 = vmatprep.subr.mxu0 0.0
  %154 = vmatpush1.msra.mxu0 0.0
  %155 = vmatprep.subr.mxu0 0.0
  %156 = vmatpush1.msra.mxu0 0.0
  %157 = vmatprep.subr.mxu0 0.0
  %158 = vmatpush1.msra.mxu0 0.0
  %159 = vmatprep.subr.mxu0 0.0
  %160 = vmatpush1.msra.mxu0 0.0
  %161 = vmatprep.subr.mxu0 0.0
  %162 = vmatpush1.msra.mxu0 0.0
  %163 = vmatprep.subr.mxu0 0.0
  %164 = vmatpush1.msra.mxu0 0.0
  %165 = vmatprep.subr.mxu0 0.0
  %166 = vmatpush1.msra.mxu0 0.0
  %167 = vmatprep.subr.mxu0 0.0
  %168 = vmatpush1.msra.mxu0 0.0
  %169 = vmatprep.subr.mxu0 0.0
  %170 = vmatpush1.msra.mxu0 0.0
  %171 = vmatprep.subr.mxu0 0.0
  %172 = vmatpush1.msra.mxu0 0.0
  %173 = vmatprep.subr.mxu0 0.0
  %174 = vmatpush1.msra.mxu0 0.0
  %175 = vmatprep.subr.mxu0 0.0
  %176 = vmatpush1.msra.mxu0 0.0
  %177 = vmatprep.subr.mxu0 0.0
  %178 = vmatpush1.msra.mxu0 0.0
  %179 = vmatprep.subr.mxu0 0.0
  %180 = vmatpush1.msra.mxu0 0.0
  %181 = vmatprep.subr.mxu0 0.0
  %182 = vmatpush1.msra.mxu0 0.0
  %183 = vmatprep.subr.mxu0 0.0
  %184 = vmatpush1.msra.mxu0 0.0
  %185 = vmatprep.subr.mxu0 0.0
  %186 = vmatpush1.msra.mxu0 0.0
  %187 = vmatprep.subr.mxu0 0.0
  %188 = vmatpush1.msra.mxu0 0.0
  %189 = vmatprep.subr.mxu0 0.0
  %190 = vmatpush1.msra.mxu0 0.0
  %191 = vmatprep.subr.mxu0 0.0
  %192 = vmatpush1.msra.mxu0 0.0
  %193 = vmatprep.mubr.f32.mxu0 0.0
  %194 = vmatmul.mubr.f32.gmra.mrb[0].mxu0 %v127
  %v195 = vpop.f32.mrb[0].mxu0
  %v196 = vadd.f32 %v124, %v195
  %v197 = vpop.f32.mrb[0].mxu0
  %198 = vdwg.mxu0
  %v199 = vmax.f32 %v196, 0.0
  %v200 = vld [vmem:[%s5] sm:$0xff]
  %v201 = vld [vmem:[%s5 + $0x8] sm:$0xff]
  %v202 = vld [vmem:[#allocation2] sm:$0x1]
  %v204 = vlaneseq
  %v205 = vshrl.u32 %v204, 7
  %v206 = vsub.s32 0, %v205
  %v207 = vrot.slane %v202, %v206
  %vm209 = vcmask 130048
  %v211 = vsel %vm209, %v199, 0
  %213 = vmatprep.subr.mxu0 0.0
  %214 = vmatpush1.msra.mxu0 %v200
  %215 = vmatprep.subr.mxu0 0.0
  %216 = vmatpush1.msra.mxu0 %v201
  %217 = vmatprep.subr.mxu0 0.0
  %218 = vmatpush1.msra.mxu0 0.0
  %219 = vmatprep.subr.mxu0 0.0
  %220 = vmatpush1.msra.mxu0 0.0
  %221 = vmatprep.subr.mxu0 0.0
  %222 = vmatpush1.msra.mxu0 0.0
  %223 = vmatprep.subr.mxu0 0.0
  %224 = vmatpush1.msra.mxu0 0.0
  %225 = vmatprep.subr.mxu0 0.0
  %226 = vmatpush1.msra.mxu0 0.0
  %227 = vmatprep.subr.mxu0 0.0
  %228 = vmatpush1.msra.mxu0 0.0
  %229 = vmatprep.subr.mxu0 0.0
  %230 = vmatpush1.msra.mxu0 0.0
  %231 = vmatprep.subr.mxu0 0.0
  %232 = vmatpush1.msra.mxu0 0.0
  %233 = vmatprep.subr.mxu0 0.0
  %234 = vmatpush1.msra.mxu0 0.0
  %235 = vmatprep.subr.mxu0 0.0
  %236 = vmatpush1.msra.mxu0 0.0
  %237 = vmatprep.subr.mxu0 0.0
  %238 = vmatpush1.msra.mxu0 0.0
  %239 = vmatprep.subr.mxu0 0.0
  %240 = vmatpush1.msra.mxu0 0.0
  %241 = vmatprep.subr.mxu0 0.0
  %242 = vmatpush1.msra.mxu0 0.0
  %243 = vmatprep.subr.mxu0 0.0
  %244 = vmatpush1.msra.mxu0 0.0
  %245 = vmatprep.subr.mxu0 0.0
  %246 = vmatpush1.msra.mxu0 0.0
  %247 = vmatprep.subr.mxu0 0.0
  %248 = vmatpush1.msra.mxu0 0.0
  %249 = vmatprep.subr.mxu0 0.0
  %250 = vmatpush1.msra.mxu0 0.0
  %251 = vmatprep.subr.mxu0 0.0
  %252 = vmatpush1.msra.mxu0 0.0
  %253 = vmatprep.subr.mxu0 0.0
  %254 = vmatpush1.msra.mxu0 0.0
  %255 = vmatprep.subr.mxu0 0.0
  %256 = vmatpush1.msra.mxu0 0.0
  %257 = vmatprep.subr.mxu0 0.0
  %258 = vmatpush1.msra.mxu0 0.0
  %259 = vmatprep.subr.mxu0 0.0
  %260 = vmatpush1.msra.mxu0 0.0
  %261 = vmatprep.subr.mxu0 0.0
  %262 = vmatpush1.msra.mxu0 0.0
  %263 = vmatprep.subr.mxu0 0.0
  %264 = vmatpush1.msra.mxu0 0.0
  %265 = vmatprep.subr.mxu0 0.0
  %266 = vmatpush1.msra.mxu0 0.0
  %267 = vmatprep.subr.mxu0 0.0
  %268 = vmatpush1.msra.mxu0 0.0
  %269 = vmatprep.subr.mxu0 0.0
  %270 = vmatpush1.msra.mxu0 0.0
  %271 = vmatprep.subr.mxu0 0.0
  %272 = vmatpush1.msra.mxu0 0.0
  %273 = vmatprep.subr.mxu0 0.0
  %274 = vmatpush1.msra.mxu0 0.0
  %275 = vmatprep.subr.mxu0 0.0
  %276 = vmatpush1.msra.mxu0 0.0
  %277 = vmatprep.mubr.f32.mxu0 0.0
  %278 = vmatmul.mubr.f32.gmra.mrb[0].mxu0 %v211
  %v279 = vpop.f32.mrb[0].mxu0
  %v280 = vadd.f32 %v207, %v279
  %v281 = vpop.f32.mrb[0].mxu0
  %282 = vdwg.mxu0
  %vm283 = vcmask 1024
  %284 = vst.msk [vmem:[%s7] sm:$0x3] %vm283, %v280
  // Predicated region
  $region30: #{tpu_custom_call.1} parent=0 // pred_check
    _
  $region31: #{tpu_custom_call.1} parent=0 // pred_check_branch
    %286 = sbr.rel (0) target = $region33
  $region32: #{tpu_custom_call.1} parent=0 // pred_region
    _
  $region33: #{tpu_custom_call.1} parent=0 // pred_fallthru
    _
  // Predicated region
  $region34: #{tpu_custom_call.1} parent=0 // pred_check
    _
  $region35: #{tpu_custom_call.1} parent=0 // pred_check_branch
    %288 = sbr.rel (0) target = $region37
  $region36: #{tpu_custom_call.1} parent=0 // pred_region
    _
  $region37: #{tpu_custom_call.1} parent=0 // pred_fallthru
    _

</llo_original>
